<compile_context>
chip_gen: v6e
topology: v6e:2x2x1
jax: 0.10.0
libtpu: 0.0.40
codegen_flags: <defaults>
</compile_context>

<pallas_src>
import jax
import jax.numpy as jnp
from jax.experimental import pallas as pl
from jax.experimental.pallas import tpu as pltpu

EPS = 1e-5


# ----------------------------- kernels --------------------------------------


def _first_step():
    return (pl.program_id(0) == 0) & (pl.program_id(1) == 0)


def _accumulate_stats(y, ssum_ref, ssq_ref):
    # Per-channel sum / sum-of-squares over the point (lane) axis.  In the
    # channel-major layout this is a cross-lane reduce (XLU slot); only the
    # y*y squaring costs a VPU pass.
    ssum_ref[...] += jnp.sum(y, axis=1, keepdims=True)
    ssq_ref[...] += jnp.sum(y * y, axis=1, keepdims=True)


def _stats_kernel(x_ref, w_ref, ssum_ref, ssq_ref):
    """Pass 1 of BN1: y1 = W1 @ x_tile; accumulate per-channel stats."""
    @pl.when(_first_step())
    def _():
        ssum_ref[...] = jnp.zeros_like(ssum_ref)
        ssq_ref[...] = jnp.zeros_like(ssq_ref)

    y = jnp.dot(w_ref[...], x_ref[...], preferred_element_type=jnp.float32)
    _accumulate_stats(y, ssum_ref, ssq_ref)


def _apply_and_stats_kernel(x_ref, w_ref, scale_ref, shift_ref, wn_ref,
                            h_ref, ssum_ref, ssq_ref):
    """Recompute this layer's matmul, apply the folded BN affine + ReLU
    (emitting the activation dtype directly), then fuse the NEXT layer's
    matmul and its per-channel stats accumulation."""
    @pl.when(_first_step())
    def _():
        ssum_ref[...] = jnp.zeros_like(ssum_ref)
        ssq_ref[...] = jnp.zeros_like(ssq_ref)

    y = jnp.dot(w_ref[...], x_ref[...], preferred_element_type=jnp.float32)
    h = jnp.maximum(y * scale_ref[...] + shift_ref[...], 0.0).astype(h_ref.dtype)
    h_ref[...] = h
    yn = jnp.dot(wn_ref[...], h, preferred_element_type=jnp.float32)
    _accumulate_stats(yn, ssum_ref, ssq_ref)


def _final_kernel(h_ref, w_ref, scale_ref, shift_ref, w4_ref, cb4_ref, o_ref):
    """Recompute conv3, apply BN3 affine + ReLU, then conv4 + bias + tanh into
    a sublane-padded (OUT_PAD, TN) block (lane-dense, already in NCL layout)."""
    y = jnp.dot(w_ref[...], h_ref[...], preferred_element_type=jnp.float32)
    h = jnp.maximum(y * scale_ref[...] + shift_ref[...], 0.0).astype(w4_ref.dtype)
    z = jnp.dot(w4_ref[...], h, preferred_element_type=jnp.float32)
    o_ref[...] = jnp.tanh(z + cb4_ref[...])


# ----------------------------- wrapper ---------------------------------------


def _pick_tile_n(n, target):
    """Largest multiple of 128 that divides n and is <= target; else n."""
    t = min(target, n)
    t -= t % 128
    while t >= 128:
        if n % t == 0:
            return t
        t -= 128
    return n


def _fold_bn(ssum, ssq, gamma, beta, m):
    """Fold BN stats into a per-channel affine: normalize becomes y*scale+shift."""
    mean = ssum / m
    var = jnp.maximum(ssq / m - mean * mean, 0.0)      # one-pass, clamped
    scale = gamma.reshape(-1, 1) * jax.lax.rsqrt(var + EPS)
    shift = beta.reshape(-1, 1) - mean * scale
    return scale, shift


def pointgencon_forward(x_ncl, params, *, matmul_dtype=jnp.bfloat16, tile_n=512):
    """x_ncl: (B, C, N) float32, PyTorch NCL layout.  Returns (B, out_dim, N)."""
    B, C0, N = x_ncl.shape
    C1, C2 = C0 // 2, C0 // 4
    out_dim = params["w4"].shape[0]
    out_pad = max(8, -(-out_dim // 8) * 8)             # sublane-pad the output
    m_total = float(B * N)                             # BN batch size

    TN = _pick_tile_n(N, tile_n)
    grid = (B, N // TN)

    md = matmul_dtype
    x = x_ncl.astype(md)
    w1 = params["w1"].astype(md)                       # (C0, C0), native layout
    w2 = params["w2"].astype(md)                       # (C1, C0)
    w3 = params["w3"].astype(md)                       # (C2, C1)
    w4 = jnp.zeros((out_pad, C2), md).at[:out_dim].set(params["w4"].astype(md))
    cb4 = jnp.zeros((out_pad, 1), jnp.float32).at[:out_dim, 0].set(params["cb4"])
    # Conv biases cb1-cb3 are NOT passed: training-mode BN cancels them exactly.

    def act_spec(c):          # (B, c, N) activation tiles; points on 128 lanes
        return pl.BlockSpec((None, c, TN), lambda b, j: (b, 0, j))

    def const_spec(shape):    # weights / vectors / accumulators: one block
        return pl.BlockSpec(shape, lambda b, j: (0, 0))

    def stats_shape(c):
        return jax.ShapeDtypeStruct((c, 1), jnp.float32)

    bytes_md = jnp.dtype(md).itemsize
    est = (4 * C0 * TN * bytes_md               # double-buffered in/out tiles
           + (C0 * C0 + C1 * C0) * bytes_md     # resident weights (worst pass)
           + 6 * C0 * TN * 4                    # f32 y / y*y / affine temps
           + (1 << 20))
    vmem_limit = int(min(64 << 20, max(16 << 20, 2 * est)))

    def cparams(sem):
        return pltpu.CompilerParams(dimension_semantics=sem,
                                    vmem_limit_bytes=vmem_limit)

    arb = ("arbitrary", "arbitrary")   # stats accumulators are grid-resident

    # --- pass 1: per-channel stats of y1 = W1 @ x ----------------------------
    s1, q1 = pl.pallas_call(
        _stats_kernel,
        grid=grid,
        in_specs=[act_spec(C0), const_spec((C0, C0))],
        out_specs=(const_spec((C0, 1)), const_spec((C0, 1))),
        out_shape=(stats_shape(C0), stats_shape(C0)),
        compiler_params=cparams(arb),
    )(x, w1)
    sc1, sh1 = _fold_bn(s1, q1, params["g1"], params["be1"], m_total)

    # --- pass 2: h1 = relu(bn1(W1 @ x)); stats of y2 = W2 @ h1 ---------------
    h1, s2, q2 = pl.pallas_call(
        _apply_and_stats_kernel,
        grid=grid,
        in_specs=[act_spec(C0), const_spec((C0, C0)),
                  const_spec((C0, 1)), const_spec((C0, 1)),
                  const_spec((C1, C0))],
        out_specs=(act_spec(C0), const_spec((C1, 1)), const_spec((C1, 1))),
        out_shape=(jax.ShapeDtypeStruct((B, C0, N), md),
                   stats_shape(C1), stats_shape(C1)),
        compiler_params=cparams(arb),
    )(x, w1, sc1, sh1, w2)
    sc2, sh2 = _fold_bn(s2, q2, params["g2"], params["be2"], m_total)

    # --- pass 3: h2 = relu(bn2(W2 @ h1)); stats of y3 = W3 @ h2 --------------
    h2, s3, q3 = pl.pallas_call(
        _apply_and_stats_kernel,
        grid=grid,
        in_specs=[act_spec(C0), const_spec((C1, C0)),
                  const_spec((C1, 1)), const_spec((C1, 1)),
                  const_spec((C2, C1))],
        out_specs=(act_spec(C1), const_spec((C2, 1)), const_spec((C2, 1))),
        out_shape=(jax.ShapeDtypeStruct((B, C1, N), md),
                   stats_shape(C2), stats_shape(C2)),
        compiler_params=cparams(arb),
    )(h1, w2, sc2, sh2, w3)
    sc3, sh3 = _fold_bn(s3, q3, params["g3"], params["be3"], m_total)

    # --- pass 4: out = tanh(W4 @ relu(bn3(W3 @ h2)) + b4) --------------------
    # No global accumulator -> tiles are independent -> "parallel" (v7x 2 TCs).
    o = pl.pallas_call(
        _final_kernel,
        grid=grid,
        in_specs=[act_spec(C1), const_spec((C2, C1)),
                  const_spec((C2, 1)), const_spec((C2, 1)),
                  const_spec((out_pad, C2)), const_spec((out_pad, 1))],
        out_specs=pl.BlockSpec((None, out_pad, TN), lambda b, j: (b, 0, j)),
        out_shape=jax.ShapeDtypeStruct((B, out_pad, N), jnp.float32),
        compiler_params=cparams(("parallel", "parallel")),
    )(h2, w3, sc3, sh3, w4, cb4)

    # Output is already in PyTorch (B, out_dim, N) layout; drop sublane padding.
    return o[:, :out_dim, :]


# ----------------------------- reference & params ----------------------------


def pointgencon_reference(x_ncl, params):
    """Pure-JAX mirror of the PyTorch module (training-mode BN, biased variance,
    conv biases included) for validation."""
    def conv(h, w, b):                        # 1x1 Conv1d: (B,Cin,N) -> (B,Cout,N)
        return jnp.einsum("oc,bcn->bon", w, h) + b[None, :, None]

    def bn(h, g, be):                         # BatchNorm1d, training mode
        m = jnp.mean(h, axis=(0, 2), keepdims=True)
        v = jnp.mean((h - m) ** 2, axis=(0, 2), keepdims=True)
        return (h - m) / jnp.sqrt(v + EPS) * g[None, :, None] + be[None, :, None]

    p = params
    h = jax.nn.relu(bn(conv(x_ncl, p["w1"], p["cb1"]), p["g1"], p["be1"]))
    h = jax.nn.relu(bn(conv(h, p["w2"], p["cb2"]), p["g2"], p["be2"]))
    h = jax.nn.relu(bn(conv(h, p["w3"], p["cb3"]), p["g3"], p["be3"]))
    return jnp.tanh(conv(h, p["w4"], p["cb4"]))


def make_params(key, bottleneck_size, output_dim):
    """Deterministic synthetic parameters in native PyTorch layouts:
    conv weight (C_out, C_in), conv bias (C_out,), BN gamma/beta (C,).
    cb1-cb3 exist for reference fidelity but are not fed to the kernel."""
    c0 = bottleneck_size
    c1, c2 = c0 // 2, c0 // 4
    ks = jax.random.split(key, 14)

    def w(k, cout, cin):
        return (0.05 * jax.random.normal(k, (cout, cin))).astype(jnp.float32)

    def v(k, c, scale=0.1, offset=0.0):
        return (offset + scale * jax.random.normal(k, (c,))).astype(jnp.float32)

    return {
        "w1": w(ks[0], c0, c0), "cb1": v(ks[1], c0),
        "g1": v(ks[2], c0, 0.1, 1.0), "be1": v(ks[3], c0),
        "w2": w(ks[4], c1, c0), "cb2": v(ks[5], c1),
        "g2": v(ks[6], c1, 0.1, 1.0), "be2": v(ks[7], c1),
        "w3": w(ks[8], c2, c1), "cb3": v(ks[9], c2),
        "g3": v(ks[10], c2, 0.1, 1.0), "be3": v(ks[11], c2),
        "w4": w(ks[12], output_dim, c2), "cb4": v(ks[13], output_dim),
    }


if __name__ == "__main__":
    # Small shapes consistent with the module (module default bottleneck=2500):
    # bottleneck_size=256, output_dim=3, batch=2, 256 points per shape.
    bottleneck_size, output_dim = 256, 3
    B, N = 2, 256

    key = jax.random.PRNGKey(0)
    kx, kp = jax.random.split(key)
    x = jax.random.normal(kx, (B, bottleneck_size, N), dtype=jnp.float32)
    params = make_params(kp, bottleneck_size, output_dim)

    ref = pointgencon_reference(x, params)

    # f32 MXU path (validation): tight check against the PyTorch-style reference.
    out_f32 = jax.block_until_ready(
        pointgencon_forward(x, params, matmul_dtype=jnp.float32, tile_n=128))
    assert out_f32.shape == (B, output_dim, N)
    assert jnp.allclose(out_f32, ref, atol=1e-4, rtol=1e-4), "f32 mismatch vs reference"

    # Default path: bf16 MXU inputs, f32 accumulation / f32 BN math.
    out_bf16 = jax.block_until_ready(pointgencon_forward(x, params, tile_n=128))
    assert out_bf16.shape == (B, output_dim, N)
    assert jnp.allclose(out_bf16, ref, atol=5e-2, rtol=5e-2), "bf16 mismatch vs reference"

    print("KERNEL_OK")
</pallas_src>

<mosaic_0001>
module attributes {stable_mosaic.version = 11 : i64} {
  func.func @_stats_kernel(%arg0: i32, %arg1: i32, %arg2: memref<1x256x128xf32, #tpu.memory_space<vmem>>, %arg3: memref<256x256xf32, #tpu.memory_space<vmem>>, %arg4: memref<256x1xf32, #tpu.memory_space<vmem>>, %arg5: memref<256x1xf32, #tpu.memory_space<vmem>>) attributes {dimension_semantics = [#tpu.dimension_semantics<arbitrary>, #tpu.dimension_semantics<arbitrary>], iteration_bounds = array<i64: 2, 2>, scalar_prefetch = 0 : i64, scratch_operands = 0 : i64, tpu.core_type = #tpu.core_type<tc>, window_params = [{transform_indices = @transform_0, window_bounds = array<i64: 1, 256, 128>}, {pipeline_mode = #tpu.pipeline_mode<synchronous>, transform_indices = @transform_1, window_bounds = array<i64: 256, 256>}, {pipeline_mode = #tpu.pipeline_mode<synchronous>, transform_indices = @transform_2, window_bounds = array<i64: 256, 1>}, {pipeline_mode = #tpu.pipeline_mode<synchronous>, transform_indices = @transform_3, window_bounds = array<i64: 256, 1>}]} {
    %c0_i32 = arith.constant 0 : i32
    %0 = arith.cmpi eq, %arg0, %c0_i32 : i32
    %c0_i32_0 = arith.constant 0 : i32
    %1 = arith.cmpi eq, %arg1, %c0_i32_0 : i32
    %2 = arith.andi %0, %1 : i1
    %3 = arith.extui %2 : i1 to i32
    %c0_i32_1 = arith.constant 0 : i32
    %4 = arith.cmpi ne, %3, %c0_i32_1 : i32
    scf.if %4 {
      %cst_16 = arith.constant 0.000000e+00 : f32
      %20 = vector.broadcast %cst_16 : f32 to vector<256x1xf32>
      %c0_17 = arith.constant 0 : index
      %c0_18 = arith.constant 0 : index
      %21 = vector.load %arg4[%c0_17, %c0_18] : memref<256x1xf32, #tpu.memory_space<vmem>>, vector<256x1xf32>
      tpu.vector_store %arg4[%c0_17, %c0_18], %20 {strides = array<i32>} : memref<256x1xf32, #tpu.memory_space<vmem>>, vector<256x1xf32>,
      %cst_19 = arith.constant 0.000000e+00 : f32
      %22 = vector.broadcast %cst_19 : f32 to vector<256x1xf32>
      %c0_20 = arith.constant 0 : index
      %c0_21 = arith.constant 0 : index
      %23 = vector.load %arg5[%c0_20, %c0_21] : memref<256x1xf32, #tpu.memory_space<vmem>>, vector<256x1xf32>
      tpu.vector_store %arg5[%c0_20, %c0_21], %22 {strides = array<i32>} : memref<256x1xf32, #tpu.memory_space<vmem>>, vector<256x1xf32>,
    } else {
    }
    %c0 = arith.constant 0 : index
    %c0_2 = arith.constant 0 : index
    %5 = vector.load %arg3[%c0, %c0_2] : memref<256x256xf32, #tpu.memory_space<vmem>>, vector<256x256xf32>
    %c0_3 = arith.constant 0 : index
    %c0_4 = arith.constant 0 : index
    %c0_5 = arith.constant 0 : index
    %6 = vector.load %arg2[%c0_3, %c0_4, %c0_5] : memref<1x256x128xf32, #tpu.memory_space<vmem>>, vector<1x256x128xf32>
    %7 = vector.shape_cast %6 : vector<1x256x128xf32> to vector<256x128xf32>
    %cst = arith.constant dense<0.000000e+00> : vector<256x128xf32>
    %8 = tpu.matmul %5, %7, %cst {dimension_numbers = #tpu.dot_dimension_numbers<[1], [0], [0], [1], [0, 0, 1, 1], [], []>} : vector<256x256xf32>, vector<256x128xf32>, vector<256x128xf32> -> vector<256x128xf32>
    %c0_6 = arith.constant 0 : index
    %c0_7 = arith.constant 0 : index
    %9 = vector.load %arg4[%c0_6, %c0_7] : memref<256x1xf32, #tpu.memory_space<vmem>>, vector<256x1xf32>
    %cst_8 = arith.constant dense<0.000000e+00> : vector<256xf32>
    %10 = vector.multi_reduction <add>, %8, %cst_8 [1] : vector<256x128xf32> to vector<256xf32>
    %11 = vector.shape_cast %10 : vector<256xf32> to vector<256x1xf32>
    %12 = arith.addf %9, %11 : vector<256x1xf32>
    %c0_9 = arith.constant 0 : index
    %c0_10 = arith.constant 0 : index
    %13 = vector.load %arg4[%c0_9, %c0_10] : memref<256x1xf32, #tpu.memory_space<vmem>>, vector<256x1xf32>
    tpu.vector_store %arg4[%c0_9, %c0_10], %12 {strides = array<i32>} : memref<256x1xf32, #tpu.memory_space<vmem>>, vector<256x1xf32>,
    %c0_11 = arith.constant 0 : index
    %c0_12 = arith.constant 0 : index
    %14 = vector.load %arg5[%c0_11, %c0_12] : memref<256x1xf32, #tpu.memory_space<vmem>>, vector<256x1xf32>
    %15 = arith.mulf %8, %8 : vector<256x128xf32>
    %cst_13 = arith.constant dense<0.000000e+00> : vector<256xf32>
    %16 = vector.multi_reduction <add>, %15, %cst_13 [1] : vector<256x128xf32> to vector<256xf32>
    %17 = vector.shape_cast %16 : vector<256xf32> to vector<256x1xf32>
    %18 = arith.addf %14, %17 : vector<256x1xf32>
    %c0_14 = arith.constant 0 : index
    %c0_15 = arith.constant 0 : index
    %19 = vector.load %arg5[%c0_14, %c0_15] : memref<256x1xf32, #tpu.memory_space<vmem>>, vector<256x1xf32>
    tpu.vector_store %arg5[%c0_14, %c0_15], %18 {strides = array<i32>} : memref<256x1xf32, #tpu.memory_space<vmem>>, vector<256x1xf32>,
    return
  }
  func.func @transform_0(%arg0: i32, %arg1: i32) -> (i32, i32, i32) {
    %c0_i32 = arith.constant 0 : i32
    %c0_i32_0 = arith.constant 0 : i32
    return %arg0, %c0_i32, %arg1 : i32, i32, i32
  }
  func.func @transform_1(%arg0: i32, %arg1: i32) -> (i32, i32) {
    %c0_i32 = arith.constant 0 : i32
    %c0_i32_0 = arith.constant 0 : i32
    %c0_i32_1 = arith.constant 0 : i32
    return %c0_i32, %c0_i32_0 : i32, i32
  }
  func.func @transform_2(%arg0: i32, %arg1: i32) -> (i32, i32) {
    %c0_i32 = arith.constant 0 : i32
    %c0_i32_0 = arith.constant 0 : i32
    %c0_i32_1 = arith.constant 0 : i32
    return %c0_i32, %c0_i32_0 : i32, i32
  }
  func.func @transform_3(%arg0: i32, %arg1: i32) -> (i32, i32) {
    %c0_i32 = arith.constant 0 : i32
    %c0_i32_0 = arith.constant 0 : i32
    %c0_i32_1 = arith.constant 0 : i32
    return %c0_i32, %c0_i32_0 : i32, i32
  }
}

</mosaic_0001>

<llo_original>
// kernel: tpu_custom_call.1
$region0: #{tpu_custom_call.1}
  #allocation0 [shape = 'u32[]', space=smem, size = 0x4, offset = 0x4, fixed_abs, tag = 'smem constant byte address 0x4 - core index']
  #allocation1 [shape = 'u32[144,128]{1,0:T(1,128)}', space=vmem, size = 0x12000, scoped, tag = 'internal scratch']
  %s0 = inlined_call_operand.hbm [shape: f32[2,256,256], index: 0, kind: input, shape index: {}]
  %s1 = inlined_call_operand.hbm [shape: f32[256,256], index: 1, kind: input, shape index: {}]
  %s2 = inlined_call_operand.vmem [shape: f32[256,1], index: 2, kind: output, shape index: {0}]
  %s3 = inlined_call_operand.vmem [shape: f32[256,1], index: 3, kind: output, shape index: {1}]
  %4 = xla_tuple %s2, %s3
  %s5 = sld [smem:[#allocation0]]
  $region61: #{tpu_custom_call.1} parent=0
    _
  %s7 = ssub.s32 1, %s5
  %s8 = scalar_select 0, %s7, %s5
  $region1: #{tpu_custom_call.1} parent=0
    #allocation2 [shape = 'u8[262144]{0}', space=vmem, size = 0x40000, scoped, tag = 'input window, operand 0']
    #allocation3 [shape = 's32[2]{0}', space=sflag, size = 0x8, scoped, tag = 'scoped memory for tpu_custom_call.1']
    #allocation4 [shape = 'u8[262144]{0}', space=vmem, size = 0x40000, scoped, tag = 'input window, operand 1, single buffered']
    #allocation5 [shape = 's32[1]{0}', space=sflag, size = 0x4, scoped, tag = 'scoped memory for tpu_custom_call.1']
    %9 = vsyncpa [#allocation3], 0
    %s10 = scalar_lea.sflag [#allocation3], 1
    %11 = vsyncpa %s10, 0
    %12 = vsyncpa [#allocation5], 0
    loop: start=0, step=1, limit=6
    $region2: #{tpu_custom_call.1} parent=1 // loop_pre_header
      _
    $region3: #{tpu_custom_call.1} parent=1 // loop_header
      %s14 = sphi 0, %s18
      %p15 = scmp.ge.s32.totalorder %s14, 6
      %s21 = sphi 0, %s33
      %s22 = sphi 0, %s29
      %s23 = sphi 0, %s21
      %s24 = sphi 0, %s22
      %s25 = sphi 0, %s23
      %s26 = sphi 0, %s24
      %s38 = sphi 0, %s40
      %s41 = sphi 0, %s38
      %s42 = sphi 0, %s41
      %s58 = sphi 0, %s42
      %s62 = sphi 0, %s62
      %s64 = sphi 0, %s62
      %s65 = sphi 0, %s64
      %s79 = sphi 0, %s65
      %s83 = sphi 0, %s83
      %s85 = sphi 0, %s83
      %s86 = sphi 0, %s85
      %s100 = sphi 0, %s86
      %s104 = sphi 0, %s104
      %s106 = sphi 0, %s104
      %s107 = sphi 0, %s106
      %s121 = sphi 0, %s107
    $region4: #{tpu_custom_call.1} parent=1 // loop_header_branch
      %17 = sbr.rel (%p15) target = $region8
    $region5: #{tpu_custom_call.1} parent=1 // loop_body
      %s19 = ssub.s32 %s14, 1
      %s20 = ssub.s32 %s14, 2
      %s27 = sadd.s32 1, %s22
      %p28 = scmp.ge.s32.totalorder %s27, 2
      %s29 = scalar_select %p28, 0, %s27
      %s30 = sadd.s32 1, %s21
      %s31 = scalar_select %p28, %s30, %s21
      %p32 = scmp.ge.s32.totalorder %s31, 2
      %s33 = scalar_select %p32, 0, %s31
      %s34 = ssub.s32 %s21, %s33
      %s35 = ssub.s32 %s22, %s29
      %s36 = sor.u32 %s34, %s35
      %p37 = scmp.eq.s32.totalorder %s36, 0
      %s39 = sadd.s32 %s38, 1
      %s40 = scalar_select %p37, %s38, %s39
      %p43 = pneg %p37
      %p44 = scmp.eq.s32.totalorder %s14, 3
      %p45 = por %p43, %p44
      %p46 = scmp.ne.s32.totalorder %s38, %s41
      %p47 = scmp.eq.s32.totalorder %s14, 0
      %p48 = por %p46, %p47
      %p49 = scmp.ne.s32.totalorder %s38, %s41
      %p50 = scmp.eq.s32.totalorder %s19, 3
      %p51 = por %p49, %p50
      %p52 = scmp.ne.s32.totalorder %s41, %s42
      %p53 = scmp.eq.s32.totalorder %s19, 0
      %p54 = por %p52, %p53
      %p55 = scmp.ne.s32.totalorder %s41, %s42
      %p56 = scmp.eq.s32.totalorder %s20, 3
      %p57 = por %p55, %p56
      %p59 = scmp.ne.s32.totalorder %s42, %s58
      %p60 = scmp.eq.s32.totalorder %s20, 0
      %p61 = por %p59, %p60
      %s63 = sadd.s32 %s62, 1
      %p66 = scmp.eq.s32.totalorder %s14, 3
      %p67 = scmp.ne.s32.totalorder %s62, %s64
      %p68 = scmp.eq.s32.totalorder %s14, 0
      %p69 = por %p67, %p68
      %p70 = scmp.ne.s32.totalorder %s62, %s64
      %p71 = scmp.eq.s32.totalorder %s19, 3
      %p72 = por %p70, %p71
      %p73 = scmp.ne.s32.totalorder %s64, %s65
      %p74 = scmp.eq.s32.totalorder %s19, 0
      %p75 = por %p73, %p74
      %p76 = scmp.ne.s32.totalorder %s64, %s65
      %p77 = scmp.eq.s32.totalorder %s20, 3
      %p78 = por %p76, %p77
      %p80 = scmp.ne.s32.totalorder %s65, %s79
      %p81 = scmp.eq.s32.totalorder %s20, 0
      %p82 = por %p80, %p81
      %s84 = sadd.s32 %s83, 1
      %p87 = scmp.eq.s32.totalorder %s14, 3
      %p88 = scmp.ne.s32.totalorder %s83, %s85
      %p89 = scmp.eq.s32.totalorder %s14, 0
      %p90 = por %p88, %p89
      %p91 = scmp.ne.s32.totalorder %s83, %s85
      %p92 = scmp.eq.s32.totalorder %s19, 3
      %p93 = por %p91, %p92
      %p94 = scmp.ne.s32.totalorder %s85, %s86
      %p95 = scmp.eq.s32.totalorder %s19, 0
      %p96 = por %p94, %p95
      %p97 = scmp.ne.s32.totalorder %s85, %s86
      %p98 = scmp.eq.s32.totalorder %s20, 3
      %p99 = por %p97, %p98
      %p101 = scmp.ne.s32.totalorder %s86, %s100
      %p102 = scmp.eq.s32.totalorder %s20, 0
      %p103 = por %p101, %p102
      %s105 = sadd.s32 %s104, 1
      %p108 = scmp.eq.s32.totalorder %s14, 3
      %p109 = scmp.ne.s32.totalorder %s104, %s106
      %p110 = scmp.eq.s32.totalorder %s14, 0
      %p111 = por %p109, %p110
      %p112 = scmp.ne.s32.totalorder %s104, %s106
      %p113 = scmp.eq.s32.totalorder %s19, 3
      %p114 = por %p112, %p113
      %p115 = scmp.ne.s32.totalorder %s106, %s107
      %p116 = scmp.eq.s32.totalorder %s19, 0
      %p117 = por %p115, %p116
      %p118 = scmp.ne.s32.totalorder %s106, %s107
      %p119 = scmp.eq.s32.totalorder %s20, 3
      %p120 = por %p118, %p119
      %p122 = scmp.ne.s32.totalorder %s107, %s121
      %p123 = scmp.eq.s32.totalorder %s20, 0
      %p124 = por %p122, %p123
      %p125 = scmp.le.s32.totalorder 1, %s14
      %p126 = scmp.lt.s32.totalorder %s14, 5
      %p127 = pnand %p125, %p126
      %p128 = pneg %p127
      // Predicated region
      $region9: #{tpu_custom_call.1} parent=5 // pred_check
        _
      $region10: #{tpu_custom_call.1} parent=5 // pred_check_branch
        %130 = sbr.rel (%p127) target = $region12
      $region11: #{tpu_custom_call.1} parent=5 // pred_region
        %s131 = ssub.s32 %s14, 1
        // Predicated region
        $region13: #{tpu_custom_call.1} parent=11 // pred_check
          %p132 = pneg %p75
        $region14: #{tpu_custom_call.1} parent=11 // pred_check_branch
          %134 = sbr.rel (%p132) target = $region16
        $region15: #{tpu_custom_call.1} parent=11 // pred_region
          %s136 = ssub.s32 8192, 8192
          %137 = vsyncadd [#allocation5], %s136
          %s138 = sshll.u32 [#allocation4], 4
          %s139 = int_to_ptr.vmem [resolvable:$true] %s138
          %144 = dma.hbm_to_vmem [thread:$0]  %s1, 8192, %s139, [#allocation5], 256, 256, 16
        $region16: #{tpu_custom_call.1} parent=11 // pred_fallthru
          _
      $region12: #{tpu_custom_call.1} parent=5 // pred_fallthru
        _
      %p145 = scmp.lt.s32.totalorder %s14, 4
      // Predicated region
      $region17: #{tpu_custom_call.1} parent=5 // pred_check
        %p146 = pneg %p145
      $region18: #{tpu_custom_call.1} parent=5 // pred_check_branch
        %148 = sbr.rel (%p146) target = $region20
      $region19: #{tpu_custom_call.1} parent=5 // pred_region
        // Predicated region
        $region21: #{tpu_custom_call.1} parent=19 // pred_check
          %p149 = pneg %p48
        $region22: #{tpu_custom_call.1} parent=19 // pred_check_branch
          %151 = sbr.rel (%p149) target = $region24
        $region23: #{tpu_custom_call.1} parent=19 // pred_region
          %s152 = sand.u32 %s38, 1
          %s153 = scalar_lea.sflag [#allocation3], %s152
          %s154 = sand.u32 %s38, 1
          %s155 = smul.addr %s154, 256
          %s156 = scalar_lea.vmem [#allocation2], %s155
          %s158 = ssub.s32 4096, 4096
          %159 = vsyncadd %s153, %s158
          %s160 = smul.addr %s21, 64
          %s161 = sadd.s32 %s22, %s160
          %s162 = smul.addr %s161, 128
          %s163 = scalar_lea.hbm %s0, %s162
          %s164 = sshll.u32 %s156, 4
          %s165 = int_to_ptr.vmem [resolvable:$true] %s164
          %170 = dma.hbm_to_vmem [thread:$0]  %s163, 4096, %s165, %s153, 256, 128, 8
        $region24: #{tpu_custom_call.1} parent=19 // pred_fallthru
          _
      $region20: #{tpu_custom_call.1} parent=5 // pred_fallthru
        _
      %p171 = scmp.le.s32.totalorder 1, %s14
      %p172 = scmp.lt.s32.totalorder %s14, 5
      %p173 = pnand %p171, %p172
      %p174 = pneg %p173
      // Predicated region
      $region25: #{tpu_custom_call.1} parent=5 // pred_check
        _
      $region26: #{tpu_custom_call.1} parent=5 // pred_check_branch
        %176 = sbr.rel (%p173) target = $region28
      $region27: #{tpu_custom_call.1} parent=5 // pred_region
        %s177 = ssub.s32 %s14, 1
        %s178 = sand.u32 %s41, 1
        %s179 = scalar_lea.sflag [#allocation3], %s178
        %s180 = sand.u32 %s41, 1
        %s181 = smul.addr %s180, 256
        %s182 = scalar_lea.vmem [#allocation2], %s181
        // Predicated region
        $region29: #{tpu_custom_call.1} parent=27 // pred_check
          %p183 = pneg %p54
        $region30: #{tpu_custom_call.1} parent=27 // pred_check_branch
          %185 = sbr.rel (%p183) target = $region32
        $region31: #{tpu_custom_call.1} parent=27 // pred_region
          %186 = dma.done %s179, 4096
        $region32: #{tpu_custom_call.1} parent=27 // pred_fallthru
          _
        // Predicated region
        $region33: #{tpu_custom_call.1} parent=27 // pred_check
          %p187 = pneg %p75
        $region34: #{tpu_custom_call.1} parent=27 // pred_check_branch
          %189 = sbr.rel (%p187) target = $region36
        $region35: #{tpu_custom_call.1} parent=27 // pred_region
          %190 = dma.done [#allocation5], 8192
        $region36: #{tpu_custom_call.1} parent=27 // pred_fallthru
          _
        %s191 = sand.u32 %s41, 1
        %s192 = scalar_lea.sflag [#allocation3], %s191
        %s193 = sand.u32 %s41, 1
        %s194 = smul.addr %s193, 256
        %s195 = scalar_lea.vmem [#allocation2], %s194
        %p196 = pneg %p54
        %p197 = pneg %p51
        %p198 = pneg %p75
        %p199 = pneg %p72
        %p200 = pneg %p96
        %p201 = pneg %p93
        %p202 = pneg %p117
        %p203 = pneg %p114
        %p204 = scmp.eq.s32.totalorder %s23, 0
        %p205 = scmp.eq.s32.totalorder %s24, 0
        %p206 = pnand %p204, %p205
        %p207 = pneg %p206
        // Predicated region
        $region37: #{tpu_custom_call.1} parent=27 // pred_check
          _
        $region38: #{tpu_custom_call.1} parent=27 // pred_check_branch
          %209 = sbr.rel (%p206) target = $region40
        $region39: #{tpu_custom_call.1} parent=27 // pred_region
          %vm210 = vcmask 7168
          %211 = vst.msk [vmem:[%s2] sm:$0xff] %vm210, 0.0
          %212 = vst.msk [vmem:[%s2 + $0x8] sm:$0xff] %vm210, 0.0
          %213 = vst.msk [vmem:[%s2 + $0x10] sm:$0xff] %vm210, 0.0
          %214 = vst.msk [vmem:[%s2 + $0x18] sm:$0xff] %vm210, 0.0
          %215 = vst.msk [vmem:[%s2 + $0x20] sm:$0xff] %vm210, 0.0
          %216 = vst.msk [vmem:[%s2 + $0x28] sm:$0xff] %vm210, 0.0
          %217 = vst.msk [vmem:[%s2 + $0x30] sm:$0xff] %vm210, 0.0
          %218 = vst.msk [vmem:[%s2 + $0x38] sm:$0xff] %vm210, 0.0
          %219 = vst.msk [vmem:[%s2 + $0x40] sm:$0xff] %vm210, 0.0
          %220 = vst.msk [vmem:[%s2 + $0x48] sm:$0xff] %vm210, 0.0
          %221 = vst.msk [vmem:[%s2 + $0x50] sm:$0xff] %vm210, 0.0
          %222 = vst.msk [vmem:[%s2 + $0x58] sm:$0xff] %vm210, 0.0
          %223 = vst.msk [vmem:[%s2 + $0x60] sm:$0xff] %vm210, 0.0
          %224 = vst.msk [vmem:[%s2 + $0x68] sm:$0xff] %vm210, 0.0
          %225 = vst.msk [vmem:[%s2 + $0x70] sm:$0xff] %vm210, 0.0
          %226 = vst.msk [vmem:[%s2 + $0x78] sm:$0xff] %vm210, 0.0
          %227 = vst.msk [vmem:[%s2 + $0x80] sm:$0xff] %vm210, 0.0
          %228 = vst.msk [vmem:[%s2 + $0x88] sm:$0xff] %vm210, 0.0
          %229 = vst.msk [vmem:[%s2 + $0x90] sm:$0xff] %vm210, 0.0
          %230 = vst.msk [vmem:[%s2 + $0x98] sm:$0xff] %vm210, 0.0
          %231 = vst.msk [vmem:[%s2 + $0xa0] sm:$0xff] %vm210, 0.0
          %232 = vst.msk [vmem:[%s2 + $0xa8] sm:$0xff] %vm210, 0.0
          %233 = vst.msk [vmem:[%s2 + $0xb0] sm:$0xff] %vm210, 0.0
          %234 = vst.msk [vmem:[%s2 + $0xb8] sm:$0xff] %vm210, 0.0
          %235 = vst.msk [vmem:[%s2 + $0xc0] sm:$0xff] %vm210, 0.0
          %236 = vst.msk [vmem:[%s2 + $0xc8] sm:$0xff] %vm210, 0.0
          %237 = vst.msk [vmem:[%s2 + $0xd0] sm:$0xff] %vm210, 0.0
          %238 = vst.msk [vmem:[%s2 + $0xd8] sm:$0xff] %vm210, 0.0
          %239 = vst.msk [vmem:[%s2 + $0xe0] sm:$0xff] %vm210, 0.0
          %240 = vst.msk [vmem:[%s2 + $0xe8] sm:$0xff] %vm210, 0.0
          %241 = vst.msk [vmem:[%s2 + $0xf0] sm:$0xff] %vm210, 0.0
          %242 = vst.msk [vmem:[%s2 + $0xf8] sm:$0xff] %vm210, 0.0
          %243 = vst.msk [vmem:[%s3] sm:$0xff] %vm210, 0.0
          %244 = vst.msk [vmem:[%s3 + $0x8] sm:$0xff] %vm210, 0.0
          %245 = vst.msk [vmem:[%s3 + $0x10] sm:$0xff] %vm210, 0.0
          %246 = vst.msk [vmem:[%s3 + $0x18] sm:$0xff] %vm210, 0.0
          %247 = vst.msk [vmem:[%s3 + $0x20] sm:$0xff] %vm210, 0.0
          %248 = vst.msk [vmem:[%s3 + $0x28] sm:$0xff] %vm210, 0.0
          %249 = vst.msk [vmem:[%s3 + $0x30] sm:$0xff] %vm210, 0.0
          %250 = vst.msk [vmem:[%s3 + $0x38] sm:$0xff] %vm210, 0.0
          %251 = vst.msk [vmem:[%s3 + $0x40] sm:$0xff] %vm210, 0.0
          %252 = vst.msk [vmem:[%s3 + $0x48] sm:$0xff] %vm210, 0.0
          %253 = vst.msk [vmem:[%s3 + $0x50] sm:$0xff] %vm210, 0.0
          %254 = vst.msk [vmem:[%s3 + $0x58] sm:$0xff] %vm210, 0.0
          %255 = vst.msk [vmem:[%s3 + $0x60] sm:$0xff] %vm210, 0.0
          %256 = vst.msk [vmem:[%s3 + $0x68] sm:$0xff] %vm210, 0.0
          %257 = vst.msk [vmem:[%s3 + $0x70] sm:$0xff] %vm210, 0.0
          %258 = vst.msk [vmem:[%s3 + $0x78] sm:$0xff] %vm210, 0.0
          %259 = vst.msk [vmem:[%s3 + $0x80] sm:$0xff] %vm210, 0.0
          %260 = vst.msk [vmem:[%s3 + $0x88] sm:$0xff] %vm210, 0.0
          %261 = vst.msk [vmem:[%s3 + $0x90] sm:$0xff] %vm210, 0.0
          %262 = vst.msk [vmem:[%s3 + $0x98] sm:$0xff] %vm210, 0.0
          %263 = vst.msk [vmem:[%s3 + $0xa0] sm:$0xff] %vm210, 0.0
          %264 = vst.msk [vmem:[%s3 + $0xa8] sm:$0xff] %vm210, 0.0
          %265 = vst.msk [vmem:[%s3 + $0xb0] sm:$0xff] %vm210, 0.0
          %266 = vst.msk [vmem:[%s3 + $0xb8] sm:$0xff] %vm210, 0.0
          %267 = vst.msk [vmem:[%s3 + $0xc0] sm:$0xff] %vm210, 0.0
          %268 = vst.msk [vmem:[%s3 + $0xc8] sm:$0xff] %vm210, 0.0
          %269 = vst.msk [vmem:[%s3 + $0xd0] sm:$0xff] %vm210, 0.0
          %270 = vst.msk [vmem:[%s3 + $0xd8] sm:$0xff] %vm210, 0.0
          %271 = vst.msk [vmem:[%s3 + $0xe0] sm:$0xff] %vm210, 0.0
          %272 = vst.msk [vmem:[%s3 + $0xe8] sm:$0xff] %vm210, 0.0
          %273 = vst.msk [vmem:[%s3 + $0xf0] sm:$0xff] %vm210, 0.0
          %274 = vst.msk [vmem:[%s3 + $0xf8] sm:$0xff] %vm210, 0.0
        $region40: #{tpu_custom_call.1} parent=27 // pred_fallthru
          _
        %v275 = vld [vmem:[#allocation4] sm:$0xff]
        %v276 = vld [vmem:[#allocation4 + $0x8] sm:$0xff]
        %v277 = vld [vmem:[#allocation4 + $0x10] sm:$0xff]
        %v278 = vld [vmem:[#allocation4 + $0x18] sm:$0xff]
        %v279 = vld [vmem:[#allocation4 + $0x20] sm:$0xff]
        %v280 = vld [vmem:[#allocation4 + $0x28] sm:$0xff]
        %v281 = vld [vmem:[#allocation4 + $0x30] sm:$0xff]
        %v282 = vld [vmem:[#allocation4 + $0x38] sm:$0xff]
        %v283 = vld [vmem:[#allocation4 + $0x40] sm:$0xff]
        %v284 = vld [vmem:[#allocation4 + $0x48] sm:$0xff]
        %v285 = vld [vmem:[#allocation4 + $0x50] sm:$0xff]
        %v286 = vld [vmem:[#allocation4 + $0x58] sm:$0xff]
        %v287 = vld [vmem:[#allocation4 + $0x60] sm:$0xff]
        %v288 = vld [vmem:[#allocation4 + $0x68] sm:$0xff]
        %v289 = vld [vmem:[#allocation4 + $0x70] sm:$0xff]
        %v290 = vld [vmem:[#allocation4 + $0x78] sm:$0xff]
        %v291 = vld [vmem:[#allocation4 + $0x80] sm:$0xff]
        %v292 = vld [vmem:[#allocation4 + $0x88] sm:$0xff]
        %v293 = vld [vmem:[#allocation4 + $0x90] sm:$0xff]
        %v294 = vld [vmem:[#allocation4 + $0x98] sm:$0xff]
        %v295 = vld [vmem:[#allocation4 + $0xa0] sm:$0xff]
        %v296 = vld [vmem:[#allocation4 + $0xa8] sm:$0xff]
        %v297 = vld [vmem:[#allocation4 + $0xb0] sm:$0xff]
        %v298 = vld [vmem:[#allocation4 + $0xb8] sm:$0xff]
        %v299 = vld [vmem:[#allocation4 + $0xc0] sm:$0xff]
        %v300 = vld [vmem:[#allocation4 + $0xc8] sm:$0xff]
        %v301 = vld [vmem:[#allocation4 + $0xd0] sm:$0xff]
        %v302 = vld [vmem:[#allocation4 + $0xd8] sm:$0xff]
        %v303 = vld [vmem:[#allocation4 + $0xe0] sm:$0xff]
        %v304 = vld [vmem:[#allocation4 + $0xe8] sm:$0xff]
        %v305 = vld [vmem:[#allocation4 + $0xf0] sm:$0xff]
        %v306 = vld [vmem:[#allocation4 + $0xf8] sm:$0xff]
        %v307 = vld [vmem:[#allocation4 + $0x100] sm:$0xff]
        %v308 = vld [vmem:[#allocation4 + $0x108] sm:$0xff]
        %v309 = vld [vmem:[#allocation4 + $0x110] sm:$0xff]
        %v310 = vld [vmem:[#allocation4 + $0x118] sm:$0xff]
        %v311 = vld [vmem:[#allocation4 + $0x120] sm:$0xff]
        %v312 = vld [vmem:[#allocation4 + $0x128] sm:$0xff]
        %v313 = vld [vmem:[#allocation4 + $0x130] sm:$0xff]
        %v314 = vld [vmem:[#allocation4 + $0x138] sm:$0xff]
        %v315 = vld [vmem:[#allocation4 + $0x140] sm:$0xff]
        %v316 = vld [vmem:[#allocation4 + $0x148] sm:$0xff]
        %v317 = vld [vmem:[#allocation4 + $0x150] sm:$0xff]
        %v318 = vld [vmem:[#allocation4 + $0x158] sm:$0xff]
        %v319 = vld [vmem:[#allocation4 + $0x160] sm:$0xff]
        %v320 = vld [vmem:[#allocation4 + $0x168] sm:$0xff]
        %v321 = vld [vmem:[#allocation4 + $0x170] sm:$0xff]
        %v322 = vld [vmem:[#allocation4 + $0x178] sm:$0xff]
        %v323 = vld [vmem:[#allocation4 + $0x180] sm:$0xff]
        %v324 = vld [vmem:[#allocation4 + $0x188] sm:$0xff]
        %v325 = vld [vmem:[#allocation4 + $0x190] sm:$0xff]
        %v326 = vld [vmem:[#allocation4 + $0x198] sm:$0xff]
        %v327 = vld [vmem:[#allocation4 + $0x1a0] sm:$0xff]
        %v328 = vld [vmem:[#allocation4 + $0x1a8] sm:$0xff]
        %v329 = vld [vmem:[#allocation4 + $0x1b0] sm:$0xff]
        %v330 = vld [vmem:[#allocation4 + $0x1b8] sm:$0xff]
        %v331 = vld [vmem:[#allocation4 + $0x1c0] sm:$0xff]
        %v332 = vld [vmem:[#allocation4 + $0x1c8] sm:$0xff]
        %v333 = vld [vmem:[#allocation4 + $0x1d0] sm:$0xff]
        %v334 = vld [vmem:[#allocation4 + $0x1d8] sm:$0xff]
        %v335 = vld [vmem:[#allocation4 + $0x1e0] sm:$0xff]
        %v336 = vld [vmem:[#allocation4 + $0x1e8] sm:$0xff]
        %v337 = vld [vmem:[#allocation4 + $0x1f0] sm:$0xff]
        %v338 = vld [vmem:[#allocation4 + $0x1f8] sm:$0xff]
        %v339 = vld [vmem:[%s182] sm:$0xff]
        %v340 = vld [vmem:[%s182 + $0x8] sm:$0xff]
        %v341 = vld [vmem:[%s182 + $0x10] sm:$0xff]
        %v342 = vld [vmem:[%s182 + $0x18] sm:$0xff]
        %v343 = vld [vmem:[%s182 + $0x20] sm:$0xff]
        %v344 = vld [vmem:[%s182 + $0x28] sm:$0xff]
        %v345 = vld [vmem:[%s182 + $0x30] sm:$0xff]
        %v346 = vld [vmem:[%s182 + $0x38] sm:$0xff]
        %v347 = vld [vmem:[%s182 + $0x40] sm:$0xff]
        %v348 = vld [vmem:[%s182 + $0x48] sm:$0xff]
        %v349 = vld [vmem:[%s182 + $0x50] sm:$0xff]
        %v350 = vld [vmem:[%s182 + $0x58] sm:$0xff]
        %v351 = vld [vmem:[%s182 + $0x60] sm:$0xff]
        %v352 = vld [vmem:[%s182 + $0x68] sm:$0xff]
        %v353 = vld [vmem:[%s182 + $0x70] sm:$0xff]
        %v354 = vld [vmem:[%s182 + $0x78] sm:$0xff]
        %v355 = vld [vmem:[%s182 + $0x80] sm:$0xff]
        %v356 = vld [vmem:[%s182 + $0x88] sm:$0xff]
        %v357 = vld [vmem:[%s182 + $0x90] sm:$0xff]
        %v358 = vld [vmem:[%s182 + $0x98] sm:$0xff]
        %v359 = vld [vmem:[%s182 + $0xa0] sm:$0xff]
        %v360 = vld [vmem:[%s182 + $0xa8] sm:$0xff]
        %v361 = vld [vmem:[%s182 + $0xb0] sm:$0xff]
        %v362 = vld [vmem:[%s182 + $0xb8] sm:$0xff]
        %v363 = vld [vmem:[%s182 + $0xc0] sm:$0xff]
        %v364 = vld [vmem:[%s182 + $0xc8] sm:$0xff]
        %v365 = vld [vmem:[%s182 + $0xd0] sm:$0xff]
        %v366 = vld [vmem:[%s182 + $0xd8] sm:$0xff]
        %v367 = vld [vmem:[%s182 + $0xe0] sm:$0xff]
        %v368 = vld [vmem:[%s182 + $0xe8] sm:$0xff]
        %v369 = vld [vmem:[%s182 + $0xf0] sm:$0xff]
        %v370 = vld [vmem:[%s182 + $0xf8] sm:$0xff]
        %371 = vmatprep.subr.mxu0 0.0
        %372 = vmatpush1.msra.mxu0 %v354
        %373 = vmatprep.subr.mxu0 0.0
        %374 = vmatpush1.msra.mxu0 %v353
        %375 = vmatprep.subr.mxu0 0.0
        %376 = vmatpush1.msra.mxu0 %v352
        %377 = vmatprep.subr.mxu0 0.0
        %378 = vmatpush1.msra.mxu0 %v351
        %379 = vmatprep.subr.mxu0 0.0
        %380 = vmatpush1.msra.mxu0 %v350
        %381 = vmatprep.subr.mxu0 0.0
        %382 = vmatpush1.msra.mxu0 %v349
        %383 = vmatprep.subr.mxu0 0.0
        %384 = vmatpush1.msra.mxu0 %v348
        %385 = vmatprep.subr.mxu0 0.0
        %386 = vmatpush1.msra.mxu0 %v347
        %387 = vmatprep.subr.mxu0 0.0
        %388 = vmatpush1.msra.mxu0 %v346
        %389 = vmatprep.subr.mxu0 0.0
        %390 = vmatpush1.msra.mxu0 %v345
        %391 = vmatprep.subr.mxu0 0.0
        %392 = vmatpush1.msra.mxu0 %v344
        %393 = vmatprep.subr.mxu0 0.0
        %394 = vmatpush1.msra.mxu0 %v343
        %395 = vmatprep.subr.mxu0 0.0
        %396 = vmatpush1.msra.mxu0 %v342
        %397 = vmatprep.subr.mxu0 0.0
        %398 = vmatpush1.msra.mxu0 %v341
        %399 = vmatprep.subr.mxu0 0.0
        %400 = vmatpush1.msra.mxu0 %v340
        %401 = vmatprep.subr.mxu0 0.0
        %402 = vmatpush1.msra.mxu0 %v339
        %403 = vmatprep.subr.mxu0 0.0
        %404 = vmatpush2.msra.mxu0 %v370
        %405 = vmatprep.subr.mxu0 0.0
        %406 = vmatpush2.msra.mxu0 %v369
        %407 = vmatprep.subr.mxu0 0.0
        %408 = vmatpush2.msra.mxu0 %v368
        %409 = vmatprep.subr.mxu0 0.0
        %410 = vmatpush2.msra.mxu0 %v367
        %411 = vmatprep.subr.mxu0 0.0
        %412 = vmatpush2.msra.mxu0 %v366
        %413 = vmatprep.subr.mxu0 0.0
        %414 = vmatpush2.msra.mxu0 %v365
        %415 = vmatprep.subr.mxu0 0.0
        %416 = vmatpush2.msra.mxu0 %v364
        %417 = vmatprep.subr.mxu0 0.0
        %418 = vmatpush2.msra.mxu0 %v363
        %419 = vmatprep.subr.mxu0 0.0
        %420 = vmatpush2.msra.mxu0 %v362
        %421 = vmatprep.subr.mxu0 0.0
        %422 = vmatpush2.msra.mxu0 %v361
        %423 = vmatprep.subr.mxu0 0.0
        %424 = vmatpush2.msra.mxu0 %v360
        %425 = vmatprep.subr.mxu0 0.0
        %426 = vmatpush2.msra.mxu0 %v359
        %427 = vmatprep.subr.mxu0 0.0
        %428 = vmatpush2.msra.mxu0 %v358
        %429 = vmatprep.subr.mxu0 0.0
        %430 = vmatpush2.msra.mxu0 %v357
        %431 = vmatprep.subr.mxu0 0.0
        %432 = vmatpush2.msra.mxu0 %v356
        %433 = vmatprep.subr.mxu0 0.0
        %434 = vmatpush2.msra.mxu0 %v355
        %435 = vmatprep.mubr.f32.mxu0 %v276
        %436 = vmatmul.mubr.f32.gmra.mxu0 %v275
        %v437 = vpop.f32.mrf.mxu0
        %v438 = vadd.f32 0.0, %v437
        %v439 = vpop.f32.mrf.mxu0
        %440 = vmatprep.mubr.f32.mxu0 %v278
        %441 = vmatmul.mubr.f32.gmra.mxu0 %v277
        %v442 = vpop.f32.mrf.mxu0
        %v443 = vadd.f32 0.0, %v442
        %v444 = vpop.f32.mrf.mxu0
        %445 = vmatprep.mubr.f32.mxu0 %v280
        %446 = vmatmul.mubr.f32.gmra.mxu0 %v279
        %v447 = vpop.f32.mrf.mxu0
        %v448 = vadd.f32 0.0, %v447
        %v449 = vpop.f32.mrf.mxu0
        %450 = vmatprep.mubr.f32.mxu0 %v282
        %451 = vmatmul.mubr.f32.gmra.mxu0 %v281
        %v452 = vpop.f32.mrf.mxu0
        %v453 = vadd.f32 0.0, %v452
        %v454 = vpop.f32.mrf.mxu0
        %455 = vmatprep.mubr.f32.mxu0 %v284
        %456 = vmatmul.mubr.f32.gmra.mxu0 %v283
        %v457 = vpop.f32.mrf.mxu0
        %v458 = vadd.f32 0.0, %v457
        %v459 = vpop.f32.mrf.mxu0
        %460 = vmatprep.mubr.f32.mxu0 %v286
        %461 = vmatmul.mubr.f32.gmra.mxu0 %v285
        %v462 = vpop.f32.mrf.mxu0
        %v463 = vadd.f32 0.0, %v462
        %v464 = vpop.f32.mrf.mxu0
        %465 = vmatprep.mubr.f32.mxu0 %v288
        %466 = vmatmul.mubr.f32.gmra.mxu0 %v287
        %v467 = vpop.f32.mrf.mxu0
        %v468 = vadd.f32 0.0, %v467
        %v469 = vpop.f32.mrf.mxu0
        %470 = vmatprep.mubr.f32.mxu0 %v290
        %471 = vmatmul.mubr.f32.gmra.mxu0 %v289
        %v472 = vpop.f32.mrf.mxu0
        %v473 = vadd.f32 0.0, %v472
        %v474 = vpop.f32.mrf.mxu0
        %475 = vmatprep.mubr.f32.mxu0 %v292
        %476 = vmatmul.mubr.f32.gmra.mxu0 %v291
        %v477 = vpop.f32.mrf.mxu0
        %v478 = vadd.f32 0.0, %v477
        %v479 = vpop.f32.mrf.mxu0
        %480 = vmatprep.mubr.f32.mxu0 %v294
        %481 = vmatmul.mubr.f32.gmra.mxu0 %v293
        %v482 = vpop.f32.mrf.mxu0
        %v483 = vadd.f32 0.0, %v482
        %v484 = vpop.f32.mrf.mxu0
        %485 = vmatprep.mubr.f32.mxu0 %v296
        %486 = vmatmul.mubr.f32.gmra.mxu0 %v295
        %v487 = vpop.f32.mrf.mxu0
        %v488 = vadd.f32 0.0, %v487
        %v489 = vpop.f32.mrf.mxu0
        %490 = vmatprep.mubr.f32.mxu0 %v298
        %491 = vmatmul.mubr.f32.gmra.mxu0 %v297
        %v492 = vpop.f32.mrf.mxu0
        %v493 = vadd.f32 0.0, %v492
        %v494 = vpop.f32.mrf.mxu0
        %495 = vmatprep.mubr.f32.mxu0 %v300
        %496 = vmatmul.mubr.f32.gmra.mxu0 %v299
        %v497 = vpop.f32.mrf.mxu0
        %v498 = vadd.f32 0.0, %v497
        %v499 = vpop.f32.mrf.mxu0
        %500 = vmatprep.mubr.f32.mxu0 %v302
        %501 = vmatmul.mubr.f32.gmra.mxu0 %v301
        %v502 = vpop.f32.mrf.mxu0
        %v503 = vadd.f32 0.0, %v502
        %v504 = vpop.f32.mrf.mxu0
        %505 = vmatprep.mubr.f32.mxu0 %v304
        %506 = vmatmul.mubr.f32.gmra.mxu0 %v303
        %v507 = vpop.f32.mrf.mxu0
        %v508 = vadd.f32 0.0, %v507
        %v509 = vpop.f32.mrf.mxu0
        %510 = vmatprep.mubr.f32.mxu0 %v306
        %511 = vmatmul.mubr.f32.gmra.mxu0 %v305
        %v512 = vpop.f32.mrf.mxu0
        %v513 = vadd.f32 0.0, %v512
        %v514 = vpop.f32.mrf.mxu0
        %515 = vmatprep.mubr.f32.mxu0 %v308
        %516 = vmatmul.mubr.f32.gmra.mxu0 %v307
        %v517 = vpop.f32.mrf.mxu0
        %v518 = vadd.f32 0.0, %v517
        %v519 = vpop.f32.mrf.mxu0
        %520 = vmatprep.mubr.f32.mxu0 %v310
        %521 = vmatmul.mubr.f32.gmra.mxu0 %v309
        %v522 = vpop.f32.mrf.mxu0
        %v523 = vadd.f32 0.0, %v522
        %v524 = vpop.f32.mrf.mxu0
        %525 = vmatprep.mubr.f32.mxu0 %v312
        %526 = vmatmul.mubr.f32.gmra.mxu0 %v311
        %v527 = vpop.f32.mrf.mxu0
        %v528 = vadd.f32 0.0, %v527
        %v529 = vpop.f32.mrf.mxu0
        %530 = vmatprep.mubr.f32.mxu0 %v314
        %531 = vmatmul.mubr.f32.gmra.mxu0 %v313
        %v532 = vpop.f32.mrf.mxu0
        %v533 = vadd.f32 0.0, %v532
        %v534 = vpop.f32.mrf.mxu0
        %535 = vmatprep.mubr.f32.mxu0 %v316
        %536 = vmatmul.mubr.f32.gmra.mxu0 %v315
        %v537 = vpop.f32.mrf.mxu0
        %v538 = vadd.f32 0.0, %v537
        %v539 = vpop.f32.mrf.mxu0
        %540 = vmatprep.mubr.f32.mxu0 %v318
        %541 = vmatmul.mubr.f32.gmra.mxu0 %v317
        %v542 = vpop.f32.mrf.mxu0
        %v543 = vadd.f32 0.0, %v542
        %v544 = vpop.f32.mrf.mxu0
        %545 = vmatprep.mubr.f32.mxu0 %v320
        %546 = vmatmul.mubr.f32.gmra.mxu0 %v319
        %v547 = vpop.f32.mrf.mxu0
        %v548 = vadd.f32 0.0, %v547
        %v549 = vpop.f32.mrf.mxu0
        %550 = vmatprep.mubr.f32.mxu0 %v322
        %551 = vmatmul.mubr.f32.gmra.mxu0 %v321
        %v552 = vpop.f32.mrf.mxu0
        %v553 = vadd.f32 0.0, %v552
        %v554 = vpop.f32.mrf.mxu0
        %555 = vmatprep.mubr.f32.mxu0 %v324
        %556 = vmatmul.mubr.f32.gmra.mxu0 %v323
        %v557 = vpop.f32.mrf.mxu0
        %v558 = vadd.f32 0.0, %v557
        %v559 = vpop.f32.mrf.mxu0
        %560 = vmatprep.mubr.f32.mxu0 %v326
        %561 = vmatmul.mubr.f32.gmra.mxu0 %v325
        %v562 = vpop.f32.mrf.mxu0
        %v563 = vadd.f32 0.0, %v562
        %v564 = vpop.f32.mrf.mxu0
        %565 = vmatprep.mubr.f32.mxu0 %v328
        %566 = vmatmul.mubr.f32.gmra.mxu0 %v327
        %v567 = vpop.f32.mrf.mxu0
        %v568 = vadd.f32 0.0, %v567
        %v569 = vpop.f32.mrf.mxu0
        %570 = vmatprep.mubr.f32.mxu0 %v330
        %571 = vmatmul.mubr.f32.gmra.mxu0 %v329
        %v572 = vpop.f32.mrf.mxu0
        %v573 = vadd.f32 0.0, %v572
        %v574 = vpop.f32.mrf.mxu0
        %575 = vmatprep.mubr.f32.mxu0 %v332
        %576 = vmatmul.mubr.f32.gmra.mxu0 %v331
        %v577 = vpop.f32.mrf.mxu0
        %v578 = vadd.f32 0.0, %v577
        %v579 = vpop.f32.mrf.mxu0
        %580 = vmatprep.mubr.f32.mxu0 %v334
        %581 = vmatmul.mubr.f32.gmra.mxu0 %v333
        %v582 = vpop.f32.mrf.mxu0
        %v583 = vadd.f32 0.0, %v582
        %v584 = vpop.f32.mrf.mxu0
        %585 = vmatprep.mubr.f32.mxu0 %v336
        %586 = vmatmul.mubr.f32.gmra.mxu0 %v335
        %v587 = vpop.f32.mrf.mxu0
        %v588 = vadd.f32 0.0, %v587
        %v589 = vpop.f32.mrf.mxu0
        %590 = vmatprep.mubr.f32.mxu0 %v338
        %591 = vmatmul.mubr.f32.gmra.mxu0 %v337
        %v592 = vpop.f32.mrf.mxu0
        %v593 = vadd.f32 0.0, %v592
        %v594 = vpop.f32.mrf.mxu0
        %595 = vdwg.mxu0
        %v596 = vld [vmem:[%s2] sm:$0xff]
        %v597 = vld [vmem:[%s2 + $0x8] sm:$0xff]
        %v598 = vld [vmem:[%s2 + $0x10] sm:$0xff]
        %v599 = vld [vmem:[%s2 + $0x18] sm:$0xff]
        %v600 = vld [vmem:[%s2 + $0x20] sm:$0xff]
        %v601 = vld [vmem:[%s2 + $0x28] sm:$0xff]
        %v602 = vld [vmem:[%s2 + $0x30] sm:$0xff]
        %v603 = vld [vmem:[%s2 + $0x38] sm:$0xff]
        %v604 = vld [vmem:[%s2 + $0x40] sm:$0xff]
        %v605 = vld [vmem:[%s2 + $0x48] sm:$0xff]
        %v606 = vld [vmem:[%s2 + $0x50] sm:$0xff]
        %v607 = vld [vmem:[%s2 + $0x58] sm:$0xff]
        %v608 = vld [vmem:[%s2 + $0x60] sm:$0xff]
        %v609 = vld [vmem:[%s2 + $0x68] sm:$0xff]
        %v610 = vld [vmem:[%s2 + $0x70] sm:$0xff]
        %v611 = vld [vmem:[%s2 + $0x78] sm:$0xff]
        %v612 = vld [vmem:[%s2 + $0x80] sm:$0xff]
        %v613 = vld [vmem:[%s2 + $0x88] sm:$0xff]
        %v614 = vld [vmem:[%s2 + $0x90] sm:$0xff]
        %v615 = vld [vmem:[%s2 + $0x98] sm:$0xff]
        %v616 = vld [vmem:[%s2 + $0xa0] sm:$0xff]
        %v617 = vld [vmem:[%s2 + $0xa8] sm:$0xff]
        %v618 = vld [vmem:[%s2 + $0xb0] sm:$0xff]
        %v619 = vld [vmem:[%s2 + $0xb8] sm:$0xff]
        %v620 = vld [vmem:[%s2 + $0xc0] sm:$0xff]
        %v621 = vld [vmem:[%s2 + $0xc8] sm:$0xff]
        %v622 = vld [vmem:[%s2 + $0xd0] sm:$0xff]
        %v623 = vld [vmem:[%s2 + $0xd8] sm:$0xff]
        %v624 = vld [vmem:[%s2 + $0xe0] sm:$0xff]
        %v625 = vld [vmem:[%s2 + $0xe8] sm:$0xff]
        %v626 = vld [vmem:[%s2 + $0xf0] sm:$0xff]
        %v627 = vld [vmem:[%s2 + $0xf8] sm:$0xff]
        %628 = vadd.xlane.f32.xlu0 %v438
        %v629 = vpop.xlane.xlu0 %628
        %630 = vadd.xlane.f32.xlu0 %v443
        %v631 = vpop.xlane.xlu0 %630
        %632 = vadd.xlane.f32.xlu0 %v448
        %v633 = vpop.xlane.xlu0 %632
        %634 = vadd.xlane.f32.xlu0 %v453
        %v635 = vpop.xlane.xlu0 %634
        %636 = vadd.xlane.f32.xlu0 %v458
        %v637 = vpop.xlane.xlu0 %636
        %638 = vadd.xlane.f32.xlu0 %v463
        %v639 = vpop.xlane.xlu0 %638
        %640 = vadd.xlane.f32.xlu0 %v468
        %v641 = vpop.xlane.xlu0 %640
        %642 = vadd.xlane.f32.xlu0 %v473
        %v643 = vpop.xlane.xlu0 %642
        %644 = vadd.xlane.f32.xlu0 %v478
        %v645 = vpop.xlane.xlu0 %644
        %646 = vadd.xlane.f32.xlu0 %v483
        %v647 = vpop.xlane.xlu0 %646
        %648 = vadd.xlane.f32.xlu0 %v488
        %v649 = vpop.xlane.xlu0 %648
        %650 = vadd.xlane.f32.xlu0 %v493
        %v651 = vpop.xlane.xlu0 %650
        %652 = vadd.xlane.f32.xlu0 %v498
        %v653 = vpop.xlane.xlu0 %652
        %654 = vadd.xlane.f32.xlu0 %v503
        %v655 = vpop.xlane.xlu0 %654
        %656 = vadd.xlane.f32.xlu0 %v508
        %v657 = vpop.xlane.xlu0 %656
        %658 = vadd.xlane.f32.xlu0 %v513
        %v659 = vpop.xlane.xlu0 %658
        %660 = vadd.xlane.f32.xlu0 %v518
        %v661 = vpop.xlane.xlu0 %660
        %662 = vadd.xlane.f32.xlu0 %v523
        %v663 = vpop.xlane.xlu0 %662
        %664 = vadd.xlane.f32.xlu0 %v528
        %v665 = vpop.xlane.xlu0 %664
        %666 = vadd.xlane.f32.xlu0 %v533
        %v667 = vpop.xlane.xlu0 %666
        %668 = vadd.xlane.f32.xlu0 %v538
        %v669 = vpop.xlane.xlu0 %668
        %670 = vadd.xlane.f32.xlu0 %v543
        %v671 = vpop.xlane.xlu0 %670
        %672 = vadd.xlane.f32.xlu0 %v548
        %v673 = vpop.xlane.xlu0 %672
        %674 = vadd.xlane.f32.xlu0 %v553
        %v675 = vpop.xlane.xlu0 %674
        %676 = vadd.xlane.f32.xlu0 %v558
        %v677 = vpop.xlane.xlu0 %676
        %678 = vadd.xlane.f32.xlu0 %v563
        %v679 = vpop.xlane.xlu0 %678
        %680 = vadd.xlane.f32.xlu0 %v568
        %v681 = vpop.xlane.xlu0 %680
        %682 = vadd.xlane.f32.xlu0 %v573
        %v683 = vpop.xlane.xlu0 %682
        %684 = vadd.xlane.f32.xlu0 %v578
        %v685 = vpop.xlane.xlu0 %684
        %686 = vadd.xlane.f32.xlu0 %v583
        %v687 = vpop.xlane.xlu0 %686
        %688 = vadd.xlane.f32.xlu0 %v588
        %v689 = vpop.xlane.xlu0 %688
        %690 = vadd.xlane.f32.xlu0 %v593
        %v691 = vpop.xlane.xlu0 %690
        %v692 = vadd.f32 %v596, %v629
        %v693 = vadd.f32 %v597, %v631
        %v694 = vadd.f32 %v598, %v633
        %v695 = vadd.f32 %v599, %v635
        %v696 = vadd.f32 %v600, %v637
        %v697 = vadd.f32 %v601, %v639
        %v698 = vadd.f32 %v602, %v641
        %v699 = vadd.f32 %v603, %v643
        %v700 = vadd.f32 %v604, %v645
        %v701 = vadd.f32 %v605, %v647
        %v702 = vadd.f32 %v606, %v649
        %v703 = vadd.f32 %v607, %v651
        %v704 = vadd.f32 %v608, %v653
        %v705 = vadd.f32 %v609, %v655
        %v706 = vadd.f32 %v610, %v657
        %v707 = vadd.f32 %v611, %v659
        %v708 = vadd.f32 %v612, %v661
        %v709 = vadd.f32 %v613, %v663
        %v710 = vadd.f32 %v614, %v665
        %v711 = vadd.f32 %v615, %v667
        %v712 = vadd.f32 %v616, %v669
        %v713 = vadd.f32 %v617, %v671
        %v714 = vadd.f32 %v618, %v673
        %v715 = vadd.f32 %v619, %v675
        %v716 = vadd.f32 %v620, %v677
        %v717 = vadd.f32 %v621, %v679
        %v718 = vadd.f32 %v622, %v681
        %v719 = vadd.f32 %v623, %v683
        %v720 = vadd.f32 %v624, %v685
        %v721 = vadd.f32 %v625, %v687
        %v722 = vadd.f32 %v626, %v689
        %v723 = vadd.f32 %v627, %v691
        %vm724 = vcmask 7168
        %725 = vst.msk [vmem:[%s2] sm:$0xff] %vm724, %v692
        %726 = vst.msk [vmem:[%s2 + $0x8] sm:$0xff] %vm724, %v693
        %727 = vst.msk [vmem:[%s2 + $0x10] sm:$0xff] %vm724, %v694
        %728 = vst.msk [vmem:[%s2 + $0x18] sm:$0xff] %vm724, %v695
        %729 = vst.msk [vmem:[%s2 + $0x20] sm:$0xff] %vm724, %v696
        %730 = vst.msk [vmem:[%s2 + $0x28] sm:$0xff] %vm724, %v697
        %731 = vst.msk [vmem:[%s2 + $0x30] sm:$0xff] %vm724, %v698
        %732 = vst.msk [vmem:[%s2 + $0x38] sm:$0xff] %vm724, %v699
        %733 = vst.msk [vmem:[%s2 + $0x40] sm:$0xff] %vm724, %v700
        %734 = vst.msk [vmem:[%s2 + $0x48] sm:$0xff] %vm724, %v701
        %735 = vst.msk [vmem:[%s2 + $0x50] sm:$0xff] %vm724, %v702
        %736 = vst.msk [vmem:[%s2 + $0x58] sm:$0xff] %vm724, %v703
        %737 = vst.msk [vmem:[%s2 + $0x60] sm:$0xff] %vm724, %v704
        %738 = vst.msk [vmem:[%s2 + $0x68] sm:$0xff] %vm724, %v705
        %739 = vst.msk [vmem:[%s2 + $0x70] sm:$0xff] %vm724, %v706
        %740 = vst.msk [vmem:[%s2 + $0x78] sm:$0xff] %vm724, %v707
        %741 = vst.msk [vmem:[%s2 + $0x80] sm:$0xff] %vm724, %v708
        %742 = vst.msk [vmem:[%s2 + $0x88] sm:$0xff] %vm724, %v709
        %743 = vst.msk [vmem:[%s2 + $0x90] sm:$0xff] %vm724, %v710
        %744 = vst.msk [vmem:[%s2 + $0x98] sm:$0xff] %vm724, %v711
        %745 = vst.msk [vmem:[%s2 + $0xa0] sm:$0xff] %vm724, %v712
        %746 = vst.msk [vmem:[%s2 + $0xa8] sm:$0xff] %vm724, %v713
        %747 = vst.msk [vmem:[%s2 + $0xb0] sm:$0xff] %vm724, %v714
        %748 = vst.msk [vmem:[%s2 + $0xb8] sm:$0xff] %vm724, %v715
        %749 = vst.msk [vmem:[%s2 + $0xc0] sm:$0xff] %vm724, %v716
        %750 = vst.msk [vmem:[%s2 + $0xc8] sm:$0xff] %vm724, %v717
        %751 = vst.msk [vmem:[%s2 + $0xd0] sm:$0xff] %vm724, %v718
        %752 = vst.msk [vmem:[%s2 + $0xd8] sm:$0xff] %vm724, %v719
        %753 = vst.msk [vmem:[%s2 + $0xe0] sm:$0xff] %vm724, %v720
        %754 = vst.msk [vmem:[%s2 + $0xe8] sm:$0xff] %vm724, %v721
        %755 = vst.msk [vmem:[%s2 + $0xf0] sm:$0xff] %vm724, %v722
        %756 = vst.msk [vmem:[%s2 + $0xf8] sm:$0xff] %vm724, %v723
        %v757 = vld [vmem:[%s3] sm:$0xff]
        %v758 = vld [vmem:[%s3 + $0x8] sm:$0xff]
        %v759 = vld [vmem:[%s3 + $0x10] sm:$0xff]
        %v760 = vld [vmem:[%s3 + $0x18] sm:$0xff]
        %v761 = vld [vmem:[%s3 + $0x20] sm:$0xff]
        %v762 = vld [vmem:[%s3 + $0x28] sm:$0xff]
        %v763 = vld [vmem:[%s3 + $0x30] sm:$0xff]
        %v764 = vld [vmem:[%s3 + $0x38] sm:$0xff]
        %v765 = vld [vmem:[%s3 + $0x40] sm:$0xff]
        %v766 = vld [vmem:[%s3 + $0x48] sm:$0xff]
        %v767 = vld [vmem:[%s3 + $0x50] sm:$0xff]
        %v768 = vld [vmem:[%s3 + $0x58] sm:$0xff]
        %v769 = vld [vmem:[%s3 + $0x60] sm:$0xff]
        %v770 = vld [vmem:[%s3 + $0x68] sm:$0xff]
        %v771 = vld [vmem:[%s3 + $0x70] sm:$0xff]
        %v772 = vld [vmem:[%s3 + $0x78] sm:$0xff]
        %v773 = vld [vmem:[%s3 + $0x80] sm:$0xff]
        %v774 = vld [vmem:[%s3 + $0x88] sm:$0xff]
        %v775 = vld [vmem:[%s3 + $0x90] sm:$0xff]
        %v776 = vld [vmem:[%s3 + $0x98] sm:$0xff]
        %v777 = vld [vmem:[%s3 + $0xa0] sm:$0xff]
        %v778 = vld [vmem:[%s3 + $0xa8] sm:$0xff]
        %v779 = vld [vmem:[%s3 + $0xb0] sm:$0xff]
        %v780 = vld [vmem:[%s3 + $0xb8] sm:$0xff]
        %v781 = vld [vmem:[%s3 + $0xc0] sm:$0xff]
        %v782 = vld [vmem:[%s3 + $0xc8] sm:$0xff]
        %v783 = vld [vmem:[%s3 + $0xd0] sm:$0xff]
        %v784 = vld [vmem:[%s3 + $0xd8] sm:$0xff]
        %v785 = vld [vmem:[%s3 + $0xe0] sm:$0xff]
        %v786 = vld [vmem:[%s3 + $0xe8] sm:$0xff]
        %v787 = vld [vmem:[%s3 + $0xf0] sm:$0xff]
        %v788 = vld [vmem:[%s3 + $0xf8] sm:$0xff]
        %v789 = vmul.f32 %v438, %v438
        %v790 = vmul.f32 %v443, %v443
        %v791 = vmul.f32 %v448, %v448
        %v792 = vmul.f32 %v453, %v453
        %v793 = vmul.f32 %v458, %v458
        %v794 = vmul.f32 %v463, %v463
        %v795 = vmul.f32 %v468, %v468
        %v796 = vmul.f32 %v473, %v473
        %v797 = vmul.f32 %v478, %v478
        %v798 = vmul.f32 %v483, %v483
        %v799 = vmul.f32 %v488, %v488
        %v800 = vmul.f32 %v493, %v493
        %v801 = vmul.f32 %v498, %v498
        %v802 = vmul.f32 %v503, %v503
        %v803 = vmul.f32 %v508, %v508
        %v804 = vmul.f32 %v513, %v513
        %v805 = vmul.f32 %v518, %v518
        %v806 = vmul.f32 %v523, %v523
        %v807 = vmul.f32 %v528, %v528
        %v808 = vmul.f32 %v533, %v533
        %v809 = vmul.f32 %v538, %v538
        %v810 = vmul.f32 %v543, %v543
        %v811 = vmul.f32 %v548, %v548
        %v812 = vmul.f32 %v553, %v553
        %v813 = vmul.f32 %v558, %v558
        %v814 = vmul.f32 %v563, %v563
        %v815 = vmul.f32 %v568, %v568
        %v816 = vmul.f32 %v573, %v573
        %v817 = vmul.f32 %v578, %v578
        %v818 = vmul.f32 %v583, %v583
        %v819 = vmul.f32 %v588, %v588
        %v820 = vmul.f32 %v593, %v593
        %821 = vadd.xlane.f32.xlu0 %v789
        %v822 = vpop.xlane.xlu0 %821
        %823 = vadd.xlane.f32.xlu0 %v790
        %v824 = vpop.xlane.xlu0 %823
        %825 = vadd.xlane.f32.xlu0 %v791
        %v826 = vpop.xlane.xlu0 %825
        %827 = vadd.xlane.f32.xlu0 %v792
        %v828 = vpop.xlane.xlu0 %827
        %829 = vadd.xlane.f32.xlu0 %v793
        %v830 = vpop.xlane.xlu0 %829
        %831 = vadd.xlane.f32.xlu0 %v794
        %v832 = vpop.xlane.xlu0 %831
        %833 = vadd.xlane.f32.xlu0 %v795
        %v834 = vpop.xlane.xlu0 %833
        %835 = vadd.xlane.f32.xlu0 %v796
        %v836 = vpop.xlane.xlu0 %835
        %837 = vadd.xlane.f32.xlu0 %v797
        %v838 = vpop.xlane.xlu0 %837
        %839 = vadd.xlane.f32.xlu0 %v798
        %v840 = vpop.xlane.xlu0 %839
        %841 = vadd.xlane.f32.xlu0 %v799
        %v842 = vpop.xlane.xlu0 %841
        %843 = vadd.xlane.f32.xlu0 %v800
        %v844 = vpop.xlane.xlu0 %843
        %845 = vadd.xlane.f32.xlu0 %v801
        %v846 = vpop.xlane.xlu0 %845
        %847 = vadd.xlane.f32.xlu0 %v802
        %v848 = vpop.xlane.xlu0 %847
        %849 = vadd.xlane.f32.xlu0 %v803
        %v850 = vpop.xlane.xlu0 %849
        %851 = vadd.xlane.f32.xlu0 %v804
        %v852 = vpop.xlane.xlu0 %851
        %853 = vadd.xlane.f32.xlu0 %v805
        %v854 = vpop.xlane.xlu0 %853
        %855 = vadd.xlane.f32.xlu0 %v806
        %v856 = vpop.xlane.xlu0 %855
        %857 = vadd.xlane.f32.xlu0 %v807
        %v858 = vpop.xlane.xlu0 %857
        %859 = vadd.xlane.f32.xlu0 %v808
        %v860 = vpop.xlane.xlu0 %859
        %861 = vadd.xlane.f32.xlu0 %v809
        %v862 = vpop.xlane.xlu0 %861
        %863 = vadd.xlane.f32.xlu0 %v810
        %v864 = vpop.xlane.xlu0 %863
        %865 = vadd.xlane.f32.xlu0 %v811
        %v866 = vpop.xlane.xlu0 %865
        %867 = vadd.xlane.f32.xlu0 %v812
        %v868 = vpop.xlane.xlu0 %867
        %869 = vadd.xlane.f32.xlu0 %v813
        %v870 = vpop.xlane.xlu0 %869
        %871 = vadd.xlane.f32.xlu0 %v814
        %v872 = vpop.xlane.xlu0 %871
        %873 = vadd.xlane.f32.xlu0 %v815
        %v874 = vpop.xlane.xlu0 %873
        %875 = vadd.xlane.f32.xlu0 %v816
        %v876 = vpop.xlane.xlu0 %875
        %877 = vadd.xlane.f32.xlu0 %v817
        %v878 = vpop.xlane.xlu0 %877
        %879 = vadd.xlane.f32.xlu0 %v818
        %v880 = vpop.xlane.xlu0 %879
        %881 = vadd.xlane.f32.xlu0 %v819
        %v882 = vpop.xlane.xlu0 %881
        %883 = vadd.xlane.f32.xlu0 %v820
        %v884 = vpop.xlane.xlu0 %883
        %v885 = vadd.f32 %v757, %v822
        %v886 = vadd.f32 %v758, %v824
        %v887 = vadd.f32 %v759, %v826
        %v888 = vadd.f32 %v760, %v828
        %v889 = vadd.f32 %v761, %v830
        %v890 = vadd.f32 %v762, %v832
        %v891 = vadd.f32 %v763, %v834
        %v892 = vadd.f32 %v764, %v836
        %v893 = vadd.f32 %v765, %v838
        %v894 = vadd.f32 %v766, %v840
        %v895 = vadd.f32 %v767, %v842
        %v896 = vadd.f32 %v768, %v844
        %v897 = vadd.f32 %v769, %v846
        %v898 = vadd.f32 %v770, %v848
        %v899 = vadd.f32 %v771, %v850
        %v900 = vadd.f32 %v772, %v852
        %v901 = vadd.f32 %v773, %v854
        %v902 = vadd.f32 %v774, %v856
        %v903 = vadd.f32 %v775, %v858
        %v904 = vadd.f32 %v776, %v860
        %v905 = vadd.f32 %v777, %v862
        %v906 = vadd.f32 %v778, %v864
        %v907 = vadd.f32 %v779, %v866
        %v908 = vadd.f32 %v780, %v868
        %v909 = vadd.f32 %v781, %v870
        %v910 = vadd.f32 %v782, %v872
        %v911 = vadd.f32 %v783, %v874
        %v912 = vadd.f32 %v784, %v876
        %v913 = vadd.f32 %v785, %v878
        %v914 = vadd.f32 %v786, %v880
        %v915 = vadd.f32 %v787, %v882
        %v916 = vadd.f32 %v788, %v884
        %917 = vst.msk [vmem:[%s3] sm:$0xff] %vm724, %v885
        %918 = vst.msk [vmem:[%s3 + $0x8] sm:$0xff] %vm724, %v886
        %919 = vst.msk [vmem:[%s3 + $0x10] sm:$0xff] %vm724, %v887
        %920 = vst.msk [vmem:[%s3 + $0x18] sm:$0xff] %vm724, %v888
        %921 = vst.msk [vmem:[%s3 + $0x20] sm:$0xff] %vm724, %v889
        %922 = vst.msk [vmem:[%s3 + $0x28] sm:$0xff] %vm724, %v890
        %923 = vst.msk [vmem:[%s3 + $0x30] sm:$0xff] %vm724, %v891
        %924 = vst.msk [vmem:[%s3 + $0x38] sm:$0xff] %vm724, %v892
        %925 = vst.msk [vmem:[%s3 + $0x40] sm:$0xff] %vm724, %v893
        %926 = vst.msk [vmem:[%s3 + $0x48] sm:$0xff] %vm724, %v894
        %927 = vst.msk [vmem:[%s3 + $0x50] sm:$0xff] %vm724, %v895
        %928 = vst.msk [vmem:[%s3 + $0x58] sm:$0xff] %vm724, %v896
        %929 = vst.msk [vmem:[%s3 + $0x60] sm:$0xff] %vm724, %v897
        %930 = vst.msk [vmem:[%s3 + $0x68] sm:$0xff] %vm724, %v898
        %931 = vst.msk [vmem:[%s3 + $0x70] sm:$0xff] %vm724, %v899
        %932 = vst.msk [vmem:[%s3 + $0x78] sm:$0xff] %vm724, %v900
        %933 = vst.msk [vmem:[%s3 + $0x80] sm:$0xff] %vm724, %v901
        %934 = vst.msk [vmem:[%s3 + $0x88] sm:$0xff] %vm724, %v902
        %935 = vst.msk [vmem:[%s3 + $0x90] sm:$0xff] %vm724, %v903
        %936 = vst.msk [vmem:[%s3 + $0x98] sm:$0xff] %vm724, %v904
        %937 = vst.msk [vmem:[%s3 + $0xa0] sm:$0xff] %vm724, %v905
        %938 = vst.msk [vmem:[%s3 + $0xa8] sm:$0xff] %vm724, %v906
        %939 = vst.msk [vmem:[%s3 + $0xb0] sm:$0xff] %vm724, %v907
        %940 = vst.msk [vmem:[%s3 + $0xb8] sm:$0xff] %vm724, %v908
        %941 = vst.msk [vmem:[%s3 + $0xc0] sm:$0xff] %vm724, %v909
        %942 = vst.msk [vmem:[%s3 + $0xc8] sm:$0xff] %vm724, %v910
        %943 = vst.msk [vmem:[%s3 + $0xd0] sm:$0xff] %vm724, %v911
        %944 = vst.msk [vmem:[%s3 + $0xd8] sm:$0xff] %vm724, %v912
        %945 = vst.msk [vmem:[%s3 + $0xe0] sm:$0xff] %vm724, %v913
        %946 = vst.msk [vmem:[%s3 + $0xe8] sm:$0xff] %vm724, %v914
        %947 = vst.msk [vmem:[%s3 + $0xf0] sm:$0xff] %vm724, %v915
        %948 = vst.msk [vmem:[%s3 + $0xf8] sm:$0xff] %vm724, %v916
        // Predicated region
        $region41: #{tpu_custom_call.1} parent=27 // pred_check
          %p949 = pneg %p93
        $region42: #{tpu_custom_call.1} parent=27 // pred_check_branch
          %951 = sbr.rel (%p949) target = $region44
        $region43: #{tpu_custom_call.1} parent=27 // pred_region
          _
        $region44: #{tpu_custom_call.1} parent=27 // pred_fallthru
          _
        // Predicated region
        $region45: #{tpu_custom_call.1} parent=27 // pred_check
          %p952 = pneg %p114
        $region46: #{tpu_custom_call.1} parent=27 // pred_check_branch
          %954 = sbr.rel (%p952) target = $region48
        $region47: #{tpu_custom_call.1} parent=27 // pred_region
          _
        $region48: #{tpu_custom_call.1} parent=27 // pred_fallthru
          _
        // Predicated region
        $region49: #{tpu_custom_call.1} parent=27 // pred_check
          %p955 = pneg %p93
        $region50: #{tpu_custom_call.1} parent=27 // pred_check_branch
          %957 = sbr.rel (%p955) target = $region52
        $region51: #{tpu_custom_call.1} parent=27 // pred_region
          _
        $region52: #{tpu_custom_call.1} parent=27 // pred_fallthru
          _
        // Predicated region
        $region53: #{tpu_custom_call.1} parent=27 // pred_check
          %p958 = pneg %p114
        $region54: #{tpu_custom_call.1} parent=27 // pred_check_branch
          %960 = sbr.rel (%p958) target = $region56
        $region55: #{tpu_custom_call.1} parent=27 // pred_region
          _
        $region56: #{tpu_custom_call.1} parent=27 // pred_fallthru
          _
      $region28: #{tpu_custom_call.1} parent=5 // pred_fallthru
        _
      %p961 = scmp.le.s32.totalorder 2, %s14
      // Predicated region
      $region57: #{tpu_custom_call.1} parent=5 // pred_check
        %p962 = pneg %p961
      $region58: #{tpu_custom_call.1} parent=5 // pred_check_branch
        %964 = sbr.rel (%p962) target = $region60
      $region59: #{tpu_custom_call.1} parent=5 // pred_region
        %s965 = ssub.s32 %s14, 2
      $region60: #{tpu_custom_call.1} parent=5 // pred_fallthru
        _
    $region6: #{tpu_custom_call.1} parent=1 // loop_footer
      %s18 = sadd.s32 1, %s14
    $region7: #{tpu_custom_call.1} parent=1 // loop_footer_branch
      %13 = sbr.rel target = $region3
    $region8: #{tpu_custom_call.1} parent=1 // loop_exit
      _
    %966 = vsyncpa [#allocation3], 1
    %s967 = scalar_lea.sflag [#allocation3], 1
    %968 = vsyncpa %s967, 1
    %969 = vsyncpa [#allocation5], 1

</llo_original>
